<compile_context>
chip_gen: v6e
topology: v6e:2x2x1
jax: 0.10.0
libtpu: 0.0.40
codegen_flags: <defaults>
</compile_context>

<pallas_src>
import jax
import jax.numpy as jnp
from jax.experimental import pallas as pl
from jax.experimental.pallas import tpu as pltpu


def _mlp_kernel(params_ref, x_ref, o_ref):
    # params_ref : (H, 4)  columns = [w1_col, b1, w2_col, b2 (broadcast)]
    # x_ref      : (1, N_pad)   batch on the lane axis
    # o_ref      : (1, N_pad)   lane-dense output row
    p = params_ref[...]                       # (H, 4)
    w1 = p[:, 0:1]                            # (H, 1) hidden weight column (F == 1)
    b1 = p[:, 1:2]                            # (H, 1) hidden bias
    w2 = p[:, 2:3]                            # (H, 1) predict weight column (O == 1)
    b2 = p[0:1, 3:4]                          # (1, 1) predict bias

    x = x_ref[...]                            # (1, N_pad)

    # Layer 1 (K == 1): outer product on the VPU + ReLU.
    h = jnp.maximum(w1 * x + b1, 0.0)         # (H, N_pad)

    # Layer 2 (O == 1): broadcast multiply + sublane reduce over H (XLU),
    # avoiding a nearly-empty MXU tile and its result-FIFO latency.
    o_ref[...] = jnp.sum(w2 * h, axis=0, keepdims=True) + b2   # (1, N_pad)


def pack_params(w1, b1, w2, b2):
    """Pack Net parameters ONCE into a single (n_hidden, 4) f32 array.

    w1: (n_feature, n_hidden), b1: (n_hidden,)
    w2: (n_hidden, n_output),  b2: (n_output,)
    """
    n_feature, n_hidden = w1.shape
    n_output = w2.shape[1]
    # TODO(synk): general n_feature > 1 / n_output > 1 would route through an
    # MXU dot in a transposed-layout kernel; this packed fast path covers the
    # module as used in the reference script (1 -> H -> 1 regression).
    assert n_feature == 1 and n_output == 1, "packed fast path expects F == O == 1"
    packed = jnp.stack(
        [
            w1.reshape(n_hidden),                       # W1^T column
            b1.reshape(n_hidden),                       # hidden bias
            w2.reshape(n_hidden),                       # W2 column
            jnp.full((n_hidden,), b2.reshape(())[()]),  # b2 broadcast down column
        ],
        axis=1,
    ).astype(jnp.float32)                               # (H, 4)
    return packed


def net_forward(packed_params, x):
    """Pallas-backed forward pass: relu(x @ W1 + b1) @ W2 + b2.

    packed_params: (n_hidden, 4) from pack_params (prepared once at init)
    x            : (N, 1) float32
    returns      : (N, 1) float32
    """
    n = x.shape[0]
    n_pad = pl.cdiv(n, 128) * 128

    # (N, 1) -> (1, N) is data-order preserving (n_feature == 1): a reshape,
    # not a relayout/transpose.  Pad the lane axis to a multiple of 128 so all
    # loads/stores in the kernel are unmasked and full-lane.
    x_row = x.reshape(1, n)
    if n_pad != n:
        x_row = jnp.pad(x_row, ((0, 0), (0, n_pad - n)))

    vmem = pl.BlockSpec(memory_space=pltpu.MemorySpace.VMEM)

    y_row = pl.pallas_call(
        _mlp_kernel,
        out_shape=jax.ShapeDtypeStruct((1, n_pad), jnp.float32),
        in_specs=[vmem, vmem],
        out_specs=vmem,
    )(packed_params, x_row)

    # Slice off the padded lanes and return (N, 1) (again a pure reshape).
    return y_row[0, :n].reshape(n, 1)


def _torch_like_linear_init(key, fan_in, fan_out):
    """Deterministic init mimicking torch.nn.Linear: U(-1/sqrt(fan_in), 1/sqrt(fan_in))."""
    kw, kb = jax.random.split(key)
    bound = 1.0 / jnp.sqrt(float(fan_in))
    w = jax.random.uniform(kw, (fan_in, fan_out), jnp.float32, -bound, bound)
    b = jax.random.uniform(kb, (fan_out,), jnp.float32, -bound, bound)
    return w, b


if __name__ == "__main__":
    # Mirrors the reference script: x = unsqueeze(linspace(-1, 1, 100), 1)
    n_feature, n_hidden, n_output = 1, 32, 1
    N = 100

    key = jax.random.PRNGKey(0)
    k1, k2 = jax.random.split(key)

    x = jnp.expand_dims(jnp.linspace(-1.0, 1.0, N, dtype=jnp.float32), axis=1)  # (100, 1)

    w1, b1 = _torch_like_linear_init(k1, n_feature, n_hidden)  # hidden layer
    w2, b2 = _torch_like_linear_init(k2, n_hidden, n_output)   # predict layer

    # Parameters packed once at init (no per-call transposes / reshapes).
    packed_params = pack_params(w1, b1, w2, b2)                 # (32, 4)

    fwd = jax.jit(net_forward)
    y = fwd(packed_params, x)
    jax.block_until_ready(y)

    # Reference check in plain JAX (same math, same params).
    y_ref = jnp.maximum(x @ w1 + b1, 0.0) @ w2 + b2
    assert y.shape == (N, n_output)
    assert jnp.allclose(y, y_ref, atol=1e-5, rtol=1e-5)

    print("KERNEL_OK")
</pallas_src>

<mosaic_0001>
module attributes {stable_mosaic.version = 11 : i64} {
  func.func @_mlp_kernel(%arg0: memref<32x4xf32, #tpu.memory_space<vmem>>, %arg1: memref<1x128xf32, #tpu.memory_space<vmem>>, %arg2: memref<1x128xf32, #tpu.memory_space<vmem>>) attributes {dimension_semantics = [], scalar_prefetch = 0 : i64, scratch_operands = 0 : i64, tpu.core_type = #tpu.core_type<tc>} {
    %c0 = arith.constant 0 : index
    %c0_0 = arith.constant 0 : index
    %0 = vector.load %arg0[%c0, %c0_0] : memref<32x4xf32, #tpu.memory_space<vmem>>, vector<32x4xf32>
    %1 = vector.extract_strided_slice %0 {offsets = [0, 0], sizes = [32, 1], strides = [1, 1]} : vector<32x4xf32> to vector<32x1xf32>
    %2 = vector.extract_strided_slice %0 {offsets = [0, 1], sizes = [32, 1], strides = [1, 1]} : vector<32x4xf32> to vector<32x1xf32>
    %3 = vector.extract_strided_slice %0 {offsets = [0, 2], sizes = [32, 1], strides = [1, 1]} : vector<32x4xf32> to vector<32x1xf32>
    %4 = vector.extract_strided_slice %0 {offsets = [0, 3], sizes = [1, 1], strides = [1, 1]} : vector<32x4xf32> to vector<1x1xf32>
    %c0_1 = arith.constant 0 : index
    %c0_2 = arith.constant 0 : index
    %5 = vector.load %arg1[%c0_1, %c0_2] : memref<1x128xf32, #tpu.memory_space<vmem>>, vector<1x128xf32>
    %6 = vector.broadcast %1 : vector<32x1xf32> to vector<32x128xf32>
    %7 = vector.broadcast %5 : vector<1x128xf32> to vector<32x128xf32>
    %8 = arith.mulf %6, %7 : vector<32x128xf32>
    %9 = vector.broadcast %2 : vector<32x1xf32> to vector<32x128xf32>
    %10 = arith.addf %8, %9 : vector<32x128xf32>
    %cst = arith.constant 0.000000e+00 : f32
    %11 = vector.broadcast %cst : f32 to vector<32x128xf32>
    %12 = arith.maximumf %10, %11 : vector<32x128xf32>
    %13 = vector.broadcast %3 : vector<32x1xf32> to vector<32x128xf32>
    %14 = arith.mulf %13, %12 : vector<32x128xf32>
    %cst_3 = arith.constant dense<0.000000e+00> : vector<128xf32>
    %15 = vector.multi_reduction <add>, %14, %cst_3 [0] : vector<32x128xf32> to vector<128xf32>
    %16 = vector.shape_cast %15 : vector<128xf32> to vector<1x128xf32>
    %17 = vector.broadcast %4 : vector<1x1xf32> to vector<1x128xf32>
    %18 = arith.addf %16, %17 : vector<1x128xf32>
    %c0_4 = arith.constant 0 : index
    %c0_5 = arith.constant 0 : index
    %19 = vector.load %arg2[%c0_4, %c0_5] : memref<1x128xf32, #tpu.memory_space<vmem>>, vector<1x128xf32>
    tpu.vector_store %arg2[%c0_4, %c0_5], %18 {strides = array<i32>} : memref<1x128xf32, #tpu.memory_space<vmem>>, vector<1x128xf32>,
    return
  }
}

</mosaic_0001>

<llo_original>
// kernel: net_forward.1
$region0: #{net_forward.1}
  #allocation0 [shape = 'u32[]', space=smem, size = 0x4, offset = 0x4, fixed_abs, tag = 'smem constant byte address 0x4 - core index']
  #allocation1 [shape = 'u32[144,128]{1,0:T(1,128)}', space=vmem, size = 0x12000, scoped, tag = 'internal scratch']
  %s0 = inlined_call_operand.vmem [shape: f32[32,4], index: 0, kind: input, shape index: {}]
  %s1 = inlined_call_operand.vmem [shape: f32[1,128], index: 1, kind: input, shape index: {}]
  %s2 = inlined_call_operand.vmem [shape: f32[1,128], index: 2, kind: output, shape index: {}]
  %s3 = sld [smem:[#allocation0]]
  $region18: #{net_forward.1} parent=0
    _
  %s5 = ssub.s32 1, %s3
  %s6 = scalar_select 0, %s5, %s3
  // Predicated region
  $region2: #{net_forward.1} parent=0 // pred_check
    _
  $region3: #{net_forward.1} parent=0 // pred_check_branch
    %8 = sbr.rel (0) target = $region5
  $region4: #{net_forward.1} parent=0 // pred_region
    _
  $region5: #{net_forward.1} parent=0 // pred_fallthru
    _
  // Predicated region
  $region6: #{net_forward.1} parent=0 // pred_check
    _
  $region7: #{net_forward.1} parent=0 // pred_check_branch
    %10 = sbr.rel (0) target = $region9
  $region8: #{net_forward.1} parent=0 // pred_region
    _
  $region9: #{net_forward.1} parent=0 // pred_fallthru
    _
  %v11 = vld [vmem:[%s0] sm:$0xff]
  %v12 = vld [vmem:[%s0 + $0x8] sm:$0xff]
  %v13 = vld [vmem:[%s0 + $0x10] sm:$0xff]
  %v14 = vld [vmem:[%s0 + $0x18] sm:$0xff]
  %v15 = vld [vmem:[%s1] sm:$0x1]
  %17 = vset.pattern.permute.xlu0 0
  %18 = vperm.xlu0 %17, %v11
  %v19 = vpop.permute.xlu0 %18
  %22 = vset.pattern.permute.xlu0 0
  %23 = vperm.xlu0 %22, %v12
  %v24 = vpop.permute.xlu0 %23
  %27 = vset.pattern.permute.xlu0 0
  %28 = vperm.xlu0 %27, %v13
  %v29 = vpop.permute.xlu0 %28
  %32 = vset.pattern.permute.xlu0 0
  %33 = vperm.xlu0 %32, %v14
  %v34 = vpop.permute.xlu0 %33
  %v37 = vlaneseq
  %v38 = vshrl.u32 %v37, 7
  %v39 = vsub.s32 0, %v38
  %v40 = vrot.slane %v15, %v39
  %v42 = vmul.f32 %v19, %v40
  %v43 = vmul.f32 %v24, %v40
  %v44 = vmul.f32 %v29, %v40
  %v45 = vmul.f32 %v34, %v40
  %46 = vset.pattern.permute.xlu0 1
  %47 = vperm.xlu0 %46, %v11
  %v48 = vpop.permute.xlu0 %47
  %50 = vset.pattern.permute.xlu0 1
  %51 = vperm.xlu0 %50, %v12
  %v52 = vpop.permute.xlu0 %51
  %54 = vset.pattern.permute.xlu0 1
  %55 = vperm.xlu0 %54, %v13
  %v56 = vpop.permute.xlu0 %55
  %58 = vset.pattern.permute.xlu0 1
  %59 = vperm.xlu0 %58, %v14
  %v60 = vpop.permute.xlu0 %59
  %v62 = vadd.f32 %v42, %v48
  %v63 = vadd.f32 %v43, %v52
  %v64 = vadd.f32 %v44, %v56
  %v65 = vadd.f32 %v45, %v60
  %v66 = vmax.f32 %v62, 0.0
  %v67 = vmax.f32 %v63, 0.0
  %v68 = vmax.f32 %v64, 0.0
  %v69 = vmax.f32 %v65, 0.0
  %70 = vset.pattern.permute.xlu0 2
  %71 = vperm.xlu0 %70, %v11
  %v72 = vpop.permute.xlu0 %71
  %74 = vset.pattern.permute.xlu0 2
  %75 = vperm.xlu0 %74, %v12
  %v76 = vpop.permute.xlu0 %75
  %78 = vset.pattern.permute.xlu0 2
  %79 = vperm.xlu0 %78, %v13
  %v80 = vpop.permute.xlu0 %79
  %82 = vset.pattern.permute.xlu0 2
  %83 = vperm.xlu0 %82, %v14
  %v84 = vpop.permute.xlu0 %83
  %v86 = vmul.f32 %v72, %v66
  %v87 = vmul.f32 %v76, %v67
  %v88 = vmul.f32 %v80, %v68
  %v89 = vmul.f32 %v84, %v69
  %v90 = vadd.f32 %v86, %v87
  %v91 = vadd.f32 %v90, %v88
  %v92 = vadd.f32 %v91, %v89
  %v93 = vrot.slane %v92, 4
  %v94 = vadd.f32 %v92, %v93
  %v95 = vrot.slane %v94, 2
  %v96 = vadd.f32 %v94, %v95
  %v97 = vrot.slane %v96, 1
  %v98 = vadd.f32 %v96, %v97
  %99 = vset.pattern.permute.xlu0 3
  %100 = vperm.xlu0 %99, %v11
  %v101 = vpop.permute.xlu0 %100
  %v103 = vadd.f32 %v98, %v101
  %104 = vst [vmem:[%s2] sm:$0x1] %v103
  // Predicated region
  $region10: #{net_forward.1} parent=0 // pred_check
    _
  $region11: #{net_forward.1} parent=0 // pred_check_branch
    %106 = sbr.rel (0) target = $region13
  $region12: #{net_forward.1} parent=0 // pred_region
    _
  $region13: #{net_forward.1} parent=0 // pred_fallthru
    _
  // Predicated region
  $region14: #{net_forward.1} parent=0 // pred_check
    _
  $region15: #{net_forward.1} parent=0 // pred_check_branch
    %108 = sbr.rel (0) target = $region17
  $region16: #{net_forward.1} parent=0 // pred_region
    _
  $region17: #{net_forward.1} parent=0 // pred_fallthru
    _

</llo_original>
